<compile_context>
chip_gen: v7x
topology: tpu7x:2x2x1
jax: 0.10.0
libtpu: 0.0.40
codegen_flags: <defaults>
</compile_context>

<pallas_src>
import jax
import jax.numpy as jnp
from jax.experimental import pallas as pl
from jax.experimental.pallas import tpu as pltpu


# ----------------------------- kernel body ---------------------------------

def _drop_path_kernel(x_ref, mask_ref, o_ref):
    # Works for both layouts:
    #   2-D path: x_ref (B, TF),     mask_ref (B, 1)      -> lane broadcast
    #   3-D path: x_ref (1, TS, LW), mask_ref (1, 1, 1)   -> full broadcast
    o_ref[...] = x_ref[...] * mask_ref[...]


# ----------------------------- sizing helpers -------------------------------

def _sublane_min(dtype):
    itemsize = jnp.dtype(dtype).itemsize
    if itemsize >= 4:
        return 8
    if itemsize == 2:
        return 16
    return 32


def _round_down(v, m):
    return (v // m) * m


def _round_up(v, m):
    return -(-v // m) * m


def _vmem_limit_bytes(live_block_bytes):
    # Double-buffered input + output blocks + resident mask already included in
    # live_block_bytes; add 1 MiB slack.  Clamp to [16, 48] MiB: above every
    # generation's need here, below v7x's 64 MiB physical VMEM.
    need = live_block_bytes + (1 << 20)
    return int(min(max(need, 16 << 20), 48 << 20))


# ----------------------------- pallas_call paths ----------------------------

def _drop_path_2d(x2d, mask2d, target_block_bytes, min_grid_steps, lane_block,
                  donate_x):
    B, F = x2d.shape
    itemsize = jnp.dtype(x2d.dtype).itemsize
    smin = _sublane_min(x2d.dtype)
    padded_B = _round_up(B, smin)          # physical sublane padding of a tile

    if lane_block is not None:
        TF = int(lane_block)
    elif F < 128:
        TF = F                              # full-extent lane block (tiny case)
    else:
        # ~target bytes per *padded* (padded_B, TF) block, TF a multiple of 128.
        TF = (target_block_bytes // (padded_B * itemsize)) // 128 * 128
        TF = max(128, TF)
        TF = min(TF, max(128, _round_down(F, 128)))
        # Enough (even-ish) grid steps so v7x's two TCs both stream tiles.
        if -(-F // TF) < min_grid_steps and F >= min_grid_steps * 128:
            TF = max(128, _round_down(F // min_grid_steps, 128))

    grid = (pl.cdiv(F, TF),)

    block_bytes = padded_B * _round_up(TF, 128) * itemsize
    mask_bytes = padded_B * 128 * itemsize * 2
    vmem_limit = _vmem_limit_bytes(4 * block_bytes + mask_bytes)

    kwargs = {"input_output_aliases": {0: 0}} if donate_x else {}
    return pl.pallas_call(
        _drop_path_kernel,
        out_shape=jax.ShapeDtypeStruct(x2d.shape, x2d.dtype),
        grid=grid,
        in_specs=[
            pl.BlockSpec((B, TF), lambda j: (0, j)),
            # Grid-invariant mask block: stays VMEM-resident across all steps.
            pl.BlockSpec((B, 1), lambda j: (0, 0)),
        ],
        out_specs=pl.BlockSpec((B, TF), lambda j: (0, j)),
        compiler_params=pltpu.CompilerParams(
            dimension_semantics=("parallel",),
            vmem_limit_bytes=vmem_limit),
        **kwargs,
    )(x2d, mask2d)


def _drop_path_3d(x3d, mask3d, target_block_bytes, min_grid_steps,
                  sublane_block, donate_x):
    B, S, LW = x3d.shape                    # LW == 128 (lane-dense last dim)
    itemsize = jnp.dtype(x3d.dtype).itemsize
    smin = _sublane_min(x3d.dtype)

    if sublane_block is not None:
        TS = int(sublane_block)
    else:
        TS = (target_block_bytes // (LW * itemsize)) // smin * smin
        TS = max(smin, TS)
        if S >= smin:
            TS = min(TS, _round_down(S, smin))
        else:
            TS = S                          # full extent (tiny feature dim)
        # Aim for >= min_grid_steps total steps across (B, S-tiles) for v7x.
        want_per_b = max(1, -(-min_grid_steps // B))
        if -(-S // TS) < want_per_b and S >= want_per_b * smin:
            TS = max(smin, _round_down(S // want_per_b, smin))

    grid = (B, pl.cdiv(S, TS))

    block_bytes = _round_up(TS, smin) * LW * itemsize
    mask_bytes = smin * 128 * itemsize * 2
    vmem_limit = _vmem_limit_bytes(4 * block_bytes + mask_bytes)

    kwargs = {"input_output_aliases": {0: 0}} if donate_x else {}
    return pl.pallas_call(
        _drop_path_kernel,
        out_shape=jax.ShapeDtypeStruct(x3d.shape, x3d.dtype),
        grid=grid,
        in_specs=[
            pl.BlockSpec((1, TS, LW), lambda b, j: (b, j, 0)),
            pl.BlockSpec((1, 1, 1), lambda b, j: (b, 0, 0)),
        ],
        out_specs=pl.BlockSpec((1, TS, LW), lambda b, j: (b, j, 0)),
        compiler_params=pltpu.CompilerParams(
            dimension_semantics=("parallel", "parallel"),
            vmem_limit_bytes=vmem_limit),
        **kwargs,
    )(x3d, mask3d)


# ----------------------------- public wrapper -------------------------------

def drop_path_pallas(x, drop_prob: float = 0.0, training: bool = False,
                     scale_by_keep: bool = True, *, key=None,
                     min_pallas_bytes: int = 256 * 1024,
                     target_block_bytes: int = 2 * 1024 * 1024,
                     min_grid_steps: int = 8,
                     lane_block=None, sublane_block=None,
                     donate_x: bool = False):
    """Pallas implementation of timm-style drop_path (per-sample stochastic depth)."""
    if drop_prob == 0.0 or not training:
        return x
    if key is None:
        raise ValueError(
            "drop_path_pallas: a PRNG `key` is required when training=True and drop_prob > 0")

    keep_prob = 1.0 - drop_prob
    B = x.shape[0]

    # Per-sample bernoulli(keep_prob) mask, scaled by 1/keep_prob in f32 then
    # cast to x.dtype (matches timm/PyTorch, which builds the mask in x.dtype).
    mask = jax.random.bernoulli(key, p=keep_prob, shape=(B, 1)).astype(jnp.float32)
    if keep_prob > 0.0 and scale_by_keep:
        mask = mask / jnp.float32(keep_prob)
    mask = mask.astype(x.dtype)

    itemsize = jnp.dtype(x.dtype).itemsize
    total_bytes = x.size * itemsize
    if total_bytes < min_pallas_bytes:
        # Tiny activation: kernel-launch + grid overhead dominates; let XLA
        # fuse the broadcast-multiply.
        bshape = (B,) + (1,) * (x.ndim - 1)
        return x * mask.reshape(bshape)

    F = x.size // B
    smin = _sublane_min(x.dtype)

    if B < smin and F % 128 == 0 and F >= 128:
        # Small batch: pack sublanes fully via a (B, S, 128) view.
        out = _drop_path_3d(x.reshape(B, F // 128, 128), mask.reshape(B, 1, 1),
                            target_block_bytes, min_grid_steps, sublane_block,
                            donate_x)
    else:
        out = _drop_path_2d(x.reshape(B, F), mask, target_block_bytes,
                            min_grid_steps, lane_block, donate_x)
    return out.reshape(x.shape)


class DropPath:
    """Mirror of the PyTorch DropPath module (no learnable parameters)."""

    def __init__(self, drop_prob: float = 0.0, scale_by_keep: bool = True):
        self.drop_prob = drop_prob
        self.scale_by_keep = scale_by_keep
        self.training = True

    def __call__(self, x, *, key=None, **kwargs):
        return drop_path_pallas(x, self.drop_prob, self.training,
                                self.scale_by_keep, key=key, **kwargs)


# ----------------------------- self-test -------------------------------------

if __name__ == "__main__":
    key = jax.random.PRNGKey(0)
    kx, kmask, kx2, kmask2 = jax.random.split(key, 4)

    drop_prob = 0.25
    keep_prob = 1.0 - drop_prob

    def ref_drop_path(x, mkey):
        b = x.shape[0]
        m = jax.random.bernoulli(mkey, p=keep_prob, shape=(b, 1)).astype(jnp.float32)
        m = (m / jnp.float32(keep_prob)).astype(x.dtype)
        return x * m.reshape((b,) + (1,) * (x.ndim - 1))

    # --- small-batch (3-D packed) path: NCHW batch=2, channels=4, 16x16 ------
    x = jax.random.normal(kx, (2, 4, 16, 16), dtype=jnp.float32)
    out = drop_path_pallas(x, drop_prob, training=True, scale_by_keep=True,
                           key=kmask, min_pallas_bytes=0)
    out = jax.block_until_ready(out)
    assert out.shape == x.shape and out.dtype == x.dtype
    assert jnp.allclose(out, ref_drop_path(x, kmask), atol=1e-6), \
        "small-batch (3-D packed) kernel mismatch"

    # --- small-batch, multi-step grid (exercises pipelining / min_grid_steps) -
    xb = jax.random.normal(kx2, (2, 8, 32, 32), dtype=jnp.float32)
    out_b = drop_path_pallas(xb, drop_prob, training=True, scale_by_keep=True,
                             key=kmask, min_pallas_bytes=0)
    out_b = jax.block_until_ready(out_b)
    assert jnp.allclose(out_b, ref_drop_path(xb, kmask), atol=1e-6), \
        "small-batch multi-step kernel mismatch"

    # --- larger-batch (2-D lane-tiled) path: batch=16 -------------------------
    x16 = jax.random.normal(kx2, (16, 8, 16, 16), dtype=jnp.float32)
    out16 = drop_path_pallas(x16, drop_prob, training=True, scale_by_keep=True,
                             key=kmask2, min_pallas_bytes=0)
    out16 = jax.block_until_ready(out16)
    assert jnp.allclose(out16, ref_drop_path(x16, kmask2), atol=1e-6), \
        "2-D lane-tiled kernel mismatch"

    # --- module call (tiny input -> fused-JAX fallback) ----------------------
    mod = DropPath(drop_prob=drop_prob, scale_by_keep=True)
    mod.training = True
    out_mod = jax.block_until_ready(mod(x, key=kmask))
    assert jnp.allclose(out_mod, ref_drop_path(x, kmask), atol=1e-6), \
        "module training-path mismatch"

    # --- eval path (identity) -------------------------------------------------
    mod.training = False
    out_eval = jax.block_until_ready(mod(x, key=kmask))
    assert jnp.allclose(out_eval, x), "eval-path should be identity"

    print("KERNEL_OK")
</pallas_src>

<mosaic_0001>
module attributes {stable_mosaic.version = 11 : i64} {
  func.func @_drop_path_kernel(%arg0: i32, %arg1: i32, %arg2: memref<1x8x128xf32, #tpu.memory_space<vmem>>, %arg3: memref<1x1x1xf32, #tpu.memory_space<vmem>>, %arg4: memref<1x8x128xf32, #tpu.memory_space<vmem>>) attributes {dimension_semantics = [#tpu.dimension_semantics<parallel>, #tpu.dimension_semantics<parallel>], iteration_bounds = array<i64: 2, 1>, scalar_prefetch = 0 : i64, scratch_operands = 0 : i64, tpu.core_type = #tpu.core_type<tc>, window_params = [{transform_indices = @transform_0, window_bounds = array<i64: 1, 8, 128>}, {transform_indices = @transform_1, window_bounds = array<i64: 1, 1, 1>}, {transform_indices = @transform_2, window_bounds = array<i64: 1, 8, 128>}]} {
    %c0 = arith.constant 0 : index
    %c0_0 = arith.constant 0 : index
    %c0_1 = arith.constant 0 : index
    %0 = vector.load %arg2[%c0, %c0_0, %c0_1] : memref<1x8x128xf32, #tpu.memory_space<vmem>>, vector<1x8x128xf32>
    %c0_2 = arith.constant 0 : index
    %c0_3 = arith.constant 0 : index
    %c0_4 = arith.constant 0 : index
    %1 = vector.load %arg3[%c0_2, %c0_3, %c0_4] : memref<1x1x1xf32, #tpu.memory_space<vmem>>, vector<1x1x1xf32>
    %2 = vector.broadcast %1 : vector<1x1x1xf32> to vector<1x8x128xf32>
    %3 = arith.mulf %0, %2 : vector<1x8x128xf32>
    %c0_5 = arith.constant 0 : index
    %c0_6 = arith.constant 0 : index
    %c0_7 = arith.constant 0 : index
    %4 = vector.load %arg4[%c0_5, %c0_6, %c0_7] : memref<1x8x128xf32, #tpu.memory_space<vmem>>, vector<1x8x128xf32>
    tpu.vector_store %arg4[%c0_5, %c0_6, %c0_7], %3 {strides = array<i32>} : memref<1x8x128xf32, #tpu.memory_space<vmem>>, vector<1x8x128xf32>,
    return
  }
  func.func @transform_0(%arg0: i32, %arg1: i32) -> (i32, i32, i32) {
    %c0_i32 = arith.constant 0 : i32
    %c0_i32_0 = arith.constant 0 : i32
    return %arg0, %arg1, %c0_i32 : i32, i32, i32
  }
  func.func @transform_1(%arg0: i32, %arg1: i32) -> (i32, i32, i32) {
    %c0_i32 = arith.constant 0 : i32
    %c0_i32_0 = arith.constant 0 : i32
    %c0_i32_1 = arith.constant 0 : i32
    return %arg0, %c0_i32, %c0_i32_0 : i32, i32, i32
  }
  func.func @transform_2(%arg0: i32, %arg1: i32) -> (i32, i32, i32) {
    %c0_i32 = arith.constant 0 : i32
    %c0_i32_0 = arith.constant 0 : i32
    return %arg0, %arg1, %c0_i32 : i32, i32, i32
  }
}

</mosaic_0001>

<llo_original>
// kernel: tpu_custom_call.1
$region0: #{tpu_custom_call.1}
  #allocation0 [shape = 'u32[]', space=smem, size = 0x4, offset = 0x4, fixed_abs, tag = 'smem constant byte address 0x4 - core index']
  #allocation1 [shape = 'u32[144,128]{1,0:T(1,128)}', space=vmem, size = 0x12000, scoped, tag = 'internal scratch']
  %s0 = inlined_call_operand.hbm [shape: f32[2,8,128], index: 0, kind: input, shape index: {}]
  %s1 = inlined_call_operand.vmem [shape: f32[2,1,1], index: 1, kind: input, shape index: {}]
  %s2 = inlined_call_operand.hbm [shape: f32[2,8,128], index: 2, kind: output, shape index: {}]
  %s3 = sld [smem:[#allocation0]]
  $region45: #{tpu_custom_call.1} parent=0
    _
  %s5 = ssub.s32 1, %s3
  %s6 = scalar_select 0, %s5, %s3
  $region1: #{tpu_custom_call.1} parent=0
    #allocation2 [shape = 'u8[8192]{0}', space=vmem, size = 0x2000, scoped, tag = 'input window, operand 0']
    #allocation3 [shape = 's32[2]{0}', space=sflag, size = 0x8, scoped, tag = 'scoped memory for tpu_custom_call.1']
    #allocation4 [shape = 's32[2]{0}', space=sflag, size = 0x8, scoped, tag = 'scoped memory for tpu_custom_call.1']
    #allocation5 [shape = 'u8[8192]{0}', space=vmem, size = 0x2000, scoped, tag = 'output window, operand 0']
    %7 = vsyncpa [#allocation3], 0
    %s8 = scalar_lea.sflag [#allocation3], 1
    %9 = vsyncpa %s8, 0
    %10 = vsyncpa [#allocation4], 0
    %s11 = scalar_lea.sflag [#allocation4], 1
    %12 = vsyncpa %s11, 0
    loop: start=0, step=1, limit=4
    $region2: #{tpu_custom_call.1} parent=1 // loop_pre_header
      _
    $region3: #{tpu_custom_call.1} parent=1 // loop_header
      %s14 = sphi 0, %s18
      %p15 = scmp.ge.s32.totalorder %s14, 4
      %s21 = sphi 0, %s33
      %s22 = sphi 0, %s29
      %s23 = sphi 0, %s21
      %s24 = sphi 0, %s22
      %s25 = sphi 0, %s23
      %s26 = sphi 0, %s24
      %s38 = sphi 0, %s40
      %s41 = sphi 0, %s38
      %s42 = sphi 0, %s41
      %s58 = sphi 0, %s42
      %s64 = sphi 0, %s66
      %s67 = sphi 0, %s64
      %s68 = sphi 0, %s67
      %s84 = sphi 0, %s68
      %s92 = sphi 0, %s94
      %s95 = sphi 0, %s92
      %s96 = sphi 0, %s95
      %s112 = sphi 0, %s96
    $region4: #{tpu_custom_call.1} parent=1 // loop_header_branch
      %17 = sbr.rel (%p15) target = $region8
    $region5: #{tpu_custom_call.1} parent=1 // loop_body
      %s19 = ssub.s32 %s14, 1
      %s20 = ssub.s32 %s14, 2
      %s27 = sadd.s32 1, %s22
      %p28 = scmp.ge.s32.totalorder %s27, 1
      %s29 = scalar_select %p28, 0, %s27
      %s30 = sadd.s32 1, %s21
      %s31 = scalar_select %p28, %s30, %s21
      %p32 = scmp.ge.s32.totalorder %s31, 2
      %s33 = scalar_select %p32, 0, %s31
      %s34 = ssub.s32 %s21, %s33
      %s35 = ssub.s32 %s22, %s29
      %s36 = sor.u32 %s34, %s35
      %p37 = scmp.eq.s32.totalorder %s36, 0
      %s39 = sadd.s32 %s38, 1
      %s40 = scalar_select %p37, %s38, %s39
      %p43 = pneg %p37
      %p44 = scmp.eq.s32.totalorder %s14, 1
      %p45 = por %p43, %p44
      %p46 = scmp.ne.s32.totalorder %s38, %s41
      %p47 = scmp.eq.s32.totalorder %s14, 0
      %p48 = por %p46, %p47
      %p49 = scmp.ne.s32.totalorder %s38, %s41
      %p50 = scmp.eq.s32.totalorder %s19, 1
      %p51 = por %p49, %p50
      %p52 = scmp.ne.s32.totalorder %s41, %s42
      %p53 = scmp.eq.s32.totalorder %s19, 0
      %p54 = por %p52, %p53
      %p55 = scmp.ne.s32.totalorder %s41, %s42
      %p56 = scmp.eq.s32.totalorder %s20, 1
      %p57 = por %p55, %p56
      %p59 = scmp.ne.s32.totalorder %s42, %s58
      %p60 = scmp.eq.s32.totalorder %s20, 0
      %p61 = por %p59, %p60
      %s62 = ssub.s32 %s21, %s33
      %p63 = scmp.eq.s32.totalorder %s62, 0
      %s65 = sadd.s32 %s64, 1
      %s66 = scalar_select %p63, %s64, %s65
      %p69 = pneg %p63
      %p70 = scmp.eq.s32.totalorder %s14, 1
      %p71 = por %p69, %p70
      %p72 = scmp.ne.s32.totalorder %s64, %s67
      %p73 = scmp.eq.s32.totalorder %s14, 0
      %p74 = por %p72, %p73
      %p75 = scmp.ne.s32.totalorder %s64, %s67
      %p76 = scmp.eq.s32.totalorder %s19, 1
      %p77 = por %p75, %p76
      %p78 = scmp.ne.s32.totalorder %s67, %s68
      %p79 = scmp.eq.s32.totalorder %s19, 0
      %p80 = por %p78, %p79
      %p81 = scmp.ne.s32.totalorder %s67, %s68
      %p82 = scmp.eq.s32.totalorder %s20, 1
      %p83 = por %p81, %p82
      %p85 = scmp.ne.s32.totalorder %s68, %s84
      %p86 = scmp.eq.s32.totalorder %s20, 0
      %p87 = por %p85, %p86
      %s88 = ssub.s32 %s21, %s33
      %s89 = ssub.s32 %s22, %s29
      %s90 = sor.u32 %s88, %s89
      %p91 = scmp.eq.s32.totalorder %s90, 0
      %s93 = sadd.s32 %s92, 1
      %s94 = scalar_select %p91, %s92, %s93
      %p97 = pneg %p91
      %p98 = scmp.eq.s32.totalorder %s14, 1
      %p99 = por %p97, %p98
      %p100 = scmp.ne.s32.totalorder %s92, %s95
      %p101 = scmp.eq.s32.totalorder %s14, 0
      %p102 = por %p100, %p101
      %p103 = scmp.ne.s32.totalorder %s92, %s95
      %p104 = scmp.eq.s32.totalorder %s19, 1
      %p105 = por %p103, %p104
      %p106 = scmp.ne.s32.totalorder %s95, %s96
      %p107 = scmp.eq.s32.totalorder %s19, 0
      %p108 = por %p106, %p107
      %p109 = scmp.ne.s32.totalorder %s95, %s96
      %p110 = scmp.eq.s32.totalorder %s20, 1
      %p111 = por %p109, %p110
      %p113 = scmp.ne.s32.totalorder %s96, %s112
      %p114 = scmp.eq.s32.totalorder %s20, 0
      %p115 = por %p113, %p114
      %p116 = scmp.le.s32.totalorder 1, %s14
      %p117 = scmp.lt.s32.totalorder %s14, 3
      %p118 = pnand %p116, %p117
      %p119 = pneg %p118
      // Predicated region
      $region9: #{tpu_custom_call.1} parent=5 // pred_check
        _
      $region10: #{tpu_custom_call.1} parent=5 // pred_check_branch
        %121 = sbr.rel (%p118) target = $region12
      $region11: #{tpu_custom_call.1} parent=5 // pred_region
        %s122 = ssub.s32 %s14, 1
      $region12: #{tpu_custom_call.1} parent=5 // pred_fallthru
        _
      %p123 = scmp.lt.s32.totalorder %s14, 2
      // Predicated region
      $region13: #{tpu_custom_call.1} parent=5 // pred_check
        %p124 = pneg %p123
      $region14: #{tpu_custom_call.1} parent=5 // pred_check_branch
        %126 = sbr.rel (%p124) target = $region16
      $region15: #{tpu_custom_call.1} parent=5 // pred_region
        // Predicated region
        $region17: #{tpu_custom_call.1} parent=15 // pred_check
          %p127 = pneg %p48
        $region18: #{tpu_custom_call.1} parent=15 // pred_check_branch
          %129 = sbr.rel (%p127) target = $region20
        $region19: #{tpu_custom_call.1} parent=15 // pred_region
          %s130 = sand.u32 %s38, 1
          %s131 = scalar_lea.sflag [#allocation3], %s130
          %s132 = sand.u32 %s38, 1
          %s133 = smul.addr %s132, 8
          %s134 = scalar_lea.vmem [#allocation2], %s133
          %s136 = ssub.s32 128, 128
          %137 = vsyncadd %s131, %s136
          %s138 = sadd.s32 %s22, %s21
          %s139 = smul.addr %s138, 128
          %s140 = scalar_lea.hbm %s0, %s139
          %s142 = sshll.u32 %s134, 4
          %s143 = int_to_ptr.vmem [resolvable:$true] %s142
          %145 = dma.hbm_to_vmem [thread:$0]  %s140, 128, %s143, %s131
        $region20: #{tpu_custom_call.1} parent=15 // pred_fallthru
          _
        // Predicated region
        $region21: #{tpu_custom_call.1} parent=15 // pred_check
          %p146 = pneg %p74
        $region22: #{tpu_custom_call.1} parent=15 // pred_check_branch
          %148 = sbr.rel (%p146) target = $region24
        $region23: #{tpu_custom_call.1} parent=15 // pred_region
          %p149 = scmp.lt.s32.totalorder %s21, 1
          %s150 = scalar_select %p149, %s21, 1
          %s151 = scalar_lea.vmem %s1, %s150
        $region24: #{tpu_custom_call.1} parent=15 // pred_fallthru
          _
      $region16: #{tpu_custom_call.1} parent=5 // pred_fallthru
        _
      %p152 = scmp.le.s32.totalorder 1, %s14
      %p153 = scmp.lt.s32.totalorder %s14, 3
      %p154 = pnand %p152, %p153
      %p155 = pneg %p154
      // Predicated region
      $region25: #{tpu_custom_call.1} parent=5 // pred_check
        _
      $region26: #{tpu_custom_call.1} parent=5 // pred_check_branch
        %157 = sbr.rel (%p154) target = $region28
      $region27: #{tpu_custom_call.1} parent=5 // pred_region
        %s158 = ssub.s32 %s14, 1
        %s159 = sand.u32 %s41, 1
        %s160 = scalar_lea.sflag [#allocation3], %s159
        %s161 = sand.u32 %s41, 1
        %s162 = smul.addr %s161, 8
        %s163 = scalar_lea.vmem [#allocation2], %s162
        // Predicated region
        $region29: #{tpu_custom_call.1} parent=27 // pred_check
          %p164 = pneg %p54
        $region30: #{tpu_custom_call.1} parent=27 // pred_check_branch
          %166 = sbr.rel (%p164) target = $region32
        $region31: #{tpu_custom_call.1} parent=27 // pred_region
          %167 = dma.done %s160, 128
        $region32: #{tpu_custom_call.1} parent=27 // pred_fallthru
          _
        %s168 = sand.u32 %s41, 1
        %s169 = scalar_lea.sflag [#allocation3], %s168
        %s170 = sand.u32 %s41, 1
        %s171 = smul.addr %s170, 8
        %s172 = scalar_lea.vmem [#allocation2], %s171
        %p173 = pneg %p54
        %p174 = pneg %p51
        %p175 = scmp.lt.s32.totalorder %s23, 1
        %s176 = scalar_select %p175, %s23, 1
        %s177 = scalar_lea.vmem %s1, %s176
        %p178 = pneg %p80
        %p179 = pneg %p77
        %p180 = pneg %p108
        %p181 = pneg %p105
        %s182 = sand.u32 %s95, 1
        %s183 = scalar_lea.sflag [#allocation4], %s182
        %s184 = sand.u32 %s95, 1
        %s185 = smul.addr %s184, 8
        %s186 = scalar_lea.vmem [#allocation5], %s185
        %p187 = scmp.lt.s32.totalorder %s23, 1
        %s188 = scalar_select %p187, %s23, 1
        %s189 = scalar_lea.vmem %s1, %s188
        %v190 = vld [vmem:[%s163] sm:$0xff]
        %v191 = vld [vmem:[%s189] sm:$0x1]
        %v193 = vlaneseq
        %v194 = vshrl.u32 %v193, 7
        %v195 = vsub.s32 0, %v194
        %v196 = vrot.slane %v191, %v195
        %197 = vset.pattern.permute.xlu0 0
        %198 = vperm.xlu0 %197, %v196
        %v199 = vpop.permute.xlu0 %198
        %v201 = vmul.f32 %v190, %v199
        %202 = vst [vmem:[%s186] sm:$0xff] %v201
        %s203 = sand.u32 %s95, 1
        %s204 = scalar_lea.sflag [#allocation4], %s203
        %s205 = sand.u32 %s95, 1
        %s206 = smul.addr %s205, 8
        %s207 = scalar_lea.vmem [#allocation5], %s206
        // Predicated region
        $region33: #{tpu_custom_call.1} parent=27 // pred_check
          %p208 = pneg %p105
        $region34: #{tpu_custom_call.1} parent=27 // pred_check_branch
          %210 = sbr.rel (%p208) target = $region36
        $region35: #{tpu_custom_call.1} parent=27 // pred_region
          %s212 = ssub.s32 128, 128
          %213 = vsyncadd %s204, %s212
          %s214 = sadd.s32 %s24, %s23
          %s215 = smul.addr %s214, 128
          %s216 = scalar_lea.hbm %s2, %s215
          %s218 = sshll.u32 %s207, 4
          %s219 = int_to_ptr.vmem [resolvable:$true] %s218
          %221 = dma.vmem_to_hbm [thread:$0]  %s219, 128, %s216, %s204
        $region36: #{tpu_custom_call.1} parent=27 // pred_fallthru
          _
      $region28: #{tpu_custom_call.1} parent=5 // pred_fallthru
        _
      %p222 = scmp.le.s32.totalorder 2, %s14
      // Predicated region
      $region37: #{tpu_custom_call.1} parent=5 // pred_check
        %p223 = pneg %p222
      $region38: #{tpu_custom_call.1} parent=5 // pred_check_branch
        %225 = sbr.rel (%p223) target = $region40
      $region39: #{tpu_custom_call.1} parent=5 // pred_region
        %s226 = ssub.s32 %s14, 2
        // Predicated region
        $region41: #{tpu_custom_call.1} parent=39 // pred_check
          %p227 = pneg %p111
        $region42: #{tpu_custom_call.1} parent=39 // pred_check_branch
          %229 = sbr.rel (%p227) target = $region44
        $region43: #{tpu_custom_call.1} parent=39 // pred_region
          %s230 = sand.u32 %s96, 1
          %s231 = scalar_lea.sflag [#allocation4], %s230
          %s232 = sand.u32 %s96, 1
          %s233 = smul.addr %s232, 8
          %s234 = scalar_lea.vmem [#allocation5], %s233
          %235 = dma.done %s231, 128
        $region44: #{tpu_custom_call.1} parent=39 // pred_fallthru
          _
      $region40: #{tpu_custom_call.1} parent=5 // pred_fallthru
        _
    $region6: #{tpu_custom_call.1} parent=1 // loop_footer
      %s18 = sadd.s32 1, %s14
    $region7: #{tpu_custom_call.1} parent=1 // loop_footer_branch
      %13 = sbr.rel target = $region3
    $region8: #{tpu_custom_call.1} parent=1 // loop_exit
      _
    %236 = vsyncpa [#allocation3], 1
    %s237 = scalar_lea.sflag [#allocation3], 1
    %238 = vsyncpa %s237, 1
    %239 = vsyncpa [#allocation4], 1
    %s240 = scalar_lea.sflag [#allocation4], 1
    %241 = vsyncpa %s240, 1

</llo_original>
